<compile_context>
chip_gen: v7x
topology: tpu7x:2x2x1
jax: 0.10.0
libtpu: 0.0.40
codegen_flags: <defaults>
</compile_context>

<pallas_src>
import jax
import jax.numpy as jnp
import numpy as np
from jax.experimental import pallas as pl
from jax.experimental.pallas import tpu as pltpu

D_IN, D_H1, D_H2, D_OUT = 512, 256, 128, 2
TB_MAX = 512  # batch tile upper bound (sweepable 256-2048; 512 is VMEM-safe everywhere)


def _round_up(n, m):
    return ((n + m - 1) // m) * m


def mlp_kernel(x_ref, w1_ref, b1_ref, w2_ref, b2_ref, w3_ref, b3_ref, o_ref):
    # All three matmuls run on the MXU at native bf16 rate with f32 accumulation;
    # intermediate activations never leave vregs/VMEM.
    x = x_ref[...]                                                        # (TB, 512) bf16
    h1 = jnp.dot(x, w1_ref[...], preferred_element_type=jnp.float32) + b1_ref[...]
    h2 = jnp.dot(h1.astype(jnp.bfloat16), w2_ref[...],
                 preferred_element_type=jnp.float32) + b2_ref[...]
    o3 = jnp.dot(h2.astype(jnp.bfloat16), w3_ref[...],
                 preferred_element_type=jnp.float32) + b3_ref[...]
    o_ref[...] = o3.astype(o_ref.dtype)


def video_classifier_forward(x, params):
    """x: (B, 512) float32 (or bf16). Returns (B, 2) float32 logits."""
    B = x.shape[0]
    tb = min(TB_MAX, _round_up(B, 8))        # sublane-aligned batch tile
    b_pad = _round_up(B, tb)

    x = x.astype(jnp.bfloat16)               # bf16 in HBM: halves dominant DMA bytes
    if b_pad != B:
        x = jnp.pad(x, ((0, b_pad - B), (0, 0)))

    w1 = params["w1"].astype(jnp.bfloat16)   # (512, 256)
    w2 = params["w2"].astype(jnp.bfloat16)   # (256, 128)
    w3 = params["w3"].astype(jnp.bfloat16)   # (128, 2)
    b1, b2, b3 = params["b1"], params["b2"], params["b3"]   # f32 biases

    grid = (b_pad // tb,)
    out = pl.pallas_call(
        mlp_kernel,
        out_shape=jax.ShapeDtypeStruct((b_pad, D_OUT), jnp.float32),
        grid=grid,
        in_specs=[
            pl.BlockSpec((tb, D_IN), lambda i: (i, 0)),      # x tile (only moving input)
            pl.BlockSpec((D_IN, D_H1), lambda i: (0, 0)),    # W1 (resident)
            pl.BlockSpec((1, D_H1), lambda i: (0, 0)),       # b1
            pl.BlockSpec((D_H1, D_H2), lambda i: (0, 0)),    # W2
            pl.BlockSpec((1, D_H2), lambda i: (0, 0)),       # b2
            pl.BlockSpec((D_H2, D_OUT), lambda i: (0, 0)),   # W3
            pl.BlockSpec((1, D_OUT), lambda i: (0, 0)),      # b3
        ],
        out_specs=pl.BlockSpec((tb, D_OUT), lambda i: (i, 0)),
        compiler_params=pltpu.CompilerParams(
            dimension_semantics=("parallel",)),
    )(x, w1, b1, w2, b2, w3, b3)
    return out[:B]


def init_params(key):
    """Deterministic init mimicking torch.nn.Linear default (uniform +-1/sqrt(fan_in)).
    Weights stored as (in, out) = PyTorch weight transposed."""
    keys = jax.random.split(key, 6)

    def linear(kw, kb, fan_in, fan_out):
        bound = 1.0 / np.sqrt(fan_in)
        w = jax.random.uniform(kw, (fan_in, fan_out), jnp.float32, -bound, bound)
        b = jax.random.uniform(kb, (1, fan_out), jnp.float32, -bound, bound)
        return w, b

    w1, b1 = linear(keys[0], keys[1], D_IN, D_H1)
    w2, b2 = linear(keys[2], keys[3], D_H1, D_H2)
    w3, b3 = linear(keys[4], keys[5], D_H2, D_OUT)
    return dict(w1=w1, b1=b1, w2=w2, b2=b2, w3=w3, b3=b3)


def reference_forward(x, p):
    """Pure-JAX reference mirroring the kernel's mixed precision
    (bf16 operands, f32 accumulation, f32 bias add)."""
    bf, f32 = jnp.bfloat16, jnp.float32
    xb = x.astype(bf).astype(f32)
    h1 = xb @ p["w1"].astype(bf).astype(f32) + p["b1"]
    h2 = h1.astype(bf).astype(f32) @ p["w2"].astype(bf).astype(f32) + p["b2"]
    return h2.astype(bf).astype(f32) @ p["w3"].astype(bf).astype(f32) + p["b3"]


if __name__ == "__main__":
    key = jax.random.PRNGKey(0)
    k_x, k_p = jax.random.split(key)

    B = 16  # small demo batch; wrapper scales to any B (TB grows up to 512)
    x = jax.random.normal(k_x, (B, D_IN), dtype=jnp.float32)
    params = init_params(k_p)

    out = jax.block_until_ready(video_classifier_forward(x, params))

    ref = reference_forward(x, params)
    np.testing.assert_allclose(np.asarray(out), np.asarray(ref),
                               rtol=2e-2, atol=2e-2)
    assert out.shape == (B, D_OUT)
    print("KERNEL_OK")
</pallas_src>

<mosaic_0001>
module attributes {stable_mosaic.version = 11 : i64} {
  func.func @mlp_kernel(%arg0: i32, %arg1: memref<16x512xbf16, #tpu.memory_space<vmem>>, %arg2: memref<512x256xbf16, #tpu.memory_space<vmem>>, %arg3: memref<1x256xf32, #tpu.memory_space<vmem>>, %arg4: memref<256x128xbf16, #tpu.memory_space<vmem>>, %arg5: memref<1x128xf32, #tpu.memory_space<vmem>>, %arg6: memref<128x2xbf16, #tpu.memory_space<vmem>>, %arg7: memref<1x2xf32, #tpu.memory_space<vmem>>, %arg8: memref<16x2xf32, #tpu.memory_space<vmem>>) attributes {dimension_semantics = [#tpu.dimension_semantics<parallel>], iteration_bounds = array<i64: 1>, scalar_prefetch = 0 : i64, scratch_operands = 0 : i64, tpu.core_type = #tpu.core_type<tc>, window_params = [{transform_indices = @transform_0, window_bounds = array<i64: 16, 512>}, {pipeline_mode = #tpu.pipeline_mode<synchronous>, transform_indices = @transform_1, window_bounds = array<i64: 512, 256>}, {pipeline_mode = #tpu.pipeline_mode<synchronous>, transform_indices = @transform_2, window_bounds = array<i64: 1, 256>}, {pipeline_mode = #tpu.pipeline_mode<synchronous>, transform_indices = @transform_3, window_bounds = array<i64: 256, 128>}, {pipeline_mode = #tpu.pipeline_mode<synchronous>, transform_indices = @transform_4, window_bounds = array<i64: 1, 128>}, {pipeline_mode = #tpu.pipeline_mode<synchronous>, transform_indices = @transform_5, window_bounds = array<i64: 128, 2>}, {pipeline_mode = #tpu.pipeline_mode<synchronous>, transform_indices = @transform_6, window_bounds = array<i64: 1, 2>}, {transform_indices = @transform_7, window_bounds = array<i64: 16, 2>}]} {
    %c0 = arith.constant 0 : index
    %c0_0 = arith.constant 0 : index
    %0 = vector.load %arg1[%c0, %c0_0] : memref<16x512xbf16, #tpu.memory_space<vmem>>, vector<16x512xbf16>
    %c0_1 = arith.constant 0 : index
    %c0_2 = arith.constant 0 : index
    %1 = vector.load %arg2[%c0_1, %c0_2] : memref<512x256xbf16, #tpu.memory_space<vmem>>, vector<512x256xbf16>
    %cst = arith.constant dense<0.000000e+00> : vector<16x256xf32>
    %2 = tpu.matmul %0, %1, %cst {dimension_numbers = #tpu.dot_dimension_numbers<[1], [0], [0], [1], [0, 0, 1, 1], [], []>} : vector<16x512xbf16>, vector<512x256xbf16>, vector<16x256xf32> -> vector<16x256xf32>
    %c0_3 = arith.constant 0 : index
    %c0_4 = arith.constant 0 : index
    %3 = vector.load %arg3[%c0_3, %c0_4] : memref<1x256xf32, #tpu.memory_space<vmem>>, vector<1x256xf32>
    %4 = vector.broadcast %3 : vector<1x256xf32> to vector<16x256xf32>
    %5 = arith.addf %2, %4 : vector<16x256xf32>
    %6 = arith.truncf %5 : vector<16x256xf32> to vector<16x256xbf16>
    %c0_5 = arith.constant 0 : index
    %c0_6 = arith.constant 0 : index
    %7 = vector.load %arg4[%c0_5, %c0_6] : memref<256x128xbf16, #tpu.memory_space<vmem>>, vector<256x128xbf16>
    %cst_7 = arith.constant dense<0.000000e+00> : vector<16x128xf32>
    %8 = tpu.matmul %6, %7, %cst_7 {dimension_numbers = #tpu.dot_dimension_numbers<[1], [0], [0], [1], [0, 0, 1, 1], [], []>} : vector<16x256xbf16>, vector<256x128xbf16>, vector<16x128xf32> -> vector<16x128xf32>
    %c0_8 = arith.constant 0 : index
    %c0_9 = arith.constant 0 : index
    %9 = vector.load %arg5[%c0_8, %c0_9] : memref<1x128xf32, #tpu.memory_space<vmem>>, vector<1x128xf32>
    %10 = vector.broadcast %9 : vector<1x128xf32> to vector<16x128xf32>
    %11 = arith.addf %8, %10 : vector<16x128xf32>
    %12 = arith.truncf %11 : vector<16x128xf32> to vector<16x128xbf16>
    %c0_10 = arith.constant 0 : index
    %c0_11 = arith.constant 0 : index
    %13 = vector.load %arg6[%c0_10, %c0_11] : memref<128x2xbf16, #tpu.memory_space<vmem>>, vector<128x2xbf16>
    %cst_12 = arith.constant dense<0.000000e+00> : vector<16x2xf32>
    %14 = tpu.matmul %12, %13, %cst_12 {dimension_numbers = #tpu.dot_dimension_numbers<[1], [0], [0], [1], [0, 0, 1, 1], [], []>} : vector<16x128xbf16>, vector<128x2xbf16>, vector<16x2xf32> -> vector<16x2xf32>
    %c0_13 = arith.constant 0 : index
    %c0_14 = arith.constant 0 : index
    %15 = vector.load %arg7[%c0_13, %c0_14] : memref<1x2xf32, #tpu.memory_space<vmem>>, vector<1x2xf32>
    %16 = vector.broadcast %15 : vector<1x2xf32> to vector<16x2xf32>
    %17 = arith.addf %14, %16 : vector<16x2xf32>
    %c0_15 = arith.constant 0 : index
    %c0_16 = arith.constant 0 : index
    %18 = vector.load %arg8[%c0_15, %c0_16] : memref<16x2xf32, #tpu.memory_space<vmem>>, vector<16x2xf32>
    tpu.vector_store %arg8[%c0_15, %c0_16], %17 {strides = array<i32>} : memref<16x2xf32, #tpu.memory_space<vmem>>, vector<16x2xf32>,
    return
  }
  func.func @transform_0(%arg0: i32) -> (i32, i32) {
    %c0_i32 = arith.constant 0 : i32
    %c0_i32_0 = arith.constant 0 : i32
    return %arg0, %c0_i32 : i32, i32
  }
  func.func @transform_1(%arg0: i32) -> (i32, i32) {
    %c0_i32 = arith.constant 0 : i32
    %c0_i32_0 = arith.constant 0 : i32
    %c0_i32_1 = arith.constant 0 : i32
    return %c0_i32, %c0_i32_0 : i32, i32
  }
  func.func @transform_2(%arg0: i32) -> (i32, i32) {
    %c0_i32 = arith.constant 0 : i32
    %c0_i32_0 = arith.constant 0 : i32
    %c0_i32_1 = arith.constant 0 : i32
    return %c0_i32, %c0_i32_0 : i32, i32
  }
  func.func @transform_3(%arg0: i32) -> (i32, i32) {
    %c0_i32 = arith.constant 0 : i32
    %c0_i32_0 = arith.constant 0 : i32
    %c0_i32_1 = arith.constant 0 : i32
    return %c0_i32, %c0_i32_0 : i32, i32
  }
  func.func @transform_4(%arg0: i32) -> (i32, i32) {
    %c0_i32 = arith.constant 0 : i32
    %c0_i32_0 = arith.constant 0 : i32
    %c0_i32_1 = arith.constant 0 : i32
    return %c0_i32, %c0_i32_0 : i32, i32
  }
  func.func @transform_5(%arg0: i32) -> (i32, i32) {
    %c0_i32 = arith.constant 0 : i32
    %c0_i32_0 = arith.constant 0 : i32
    %c0_i32_1 = arith.constant 0 : i32
    return %c0_i32, %c0_i32_0 : i32, i32
  }
  func.func @transform_6(%arg0: i32) -> (i32, i32) {
    %c0_i32 = arith.constant 0 : i32
    %c0_i32_0 = arith.constant 0 : i32
    %c0_i32_1 = arith.constant 0 : i32
    return %c0_i32, %c0_i32_0 : i32, i32
  }
  func.func @transform_7(%arg0: i32) -> (i32, i32) {
    %c0_i32 = arith.constant 0 : i32
    %c0_i32_0 = arith.constant 0 : i32
    return %arg0, %c0_i32 : i32, i32
  }
}

</mosaic_0001>

<llo_original>
// kernel: tpu_custom_call.1
$region0: #{tpu_custom_call.1}
  #allocation0 [shape = 'u32[]', space=smem, size = 0x4, offset = 0x4, fixed_abs, tag = 'smem constant byte address 0x4 - core index']
  #allocation1 [shape = 'u32[144,128]{1,0:T(1,128)}', space=vmem, size = 0x12000, scoped, tag = 'internal scratch']
  %s0 = inlined_call_operand.vmem [shape: bf16[16,512], index: 0, kind: input, shape index: {}]
  %s1 = inlined_call_operand.hbm [shape: bf16[512,256], index: 1, kind: input, shape index: {}]
  %s2 = inlined_call_operand.vmem [shape: f32[1,256], index: 2, kind: input, shape index: {}]
  %s3 = inlined_call_operand.hbm [shape: bf16[256,128], index: 3, kind: input, shape index: {}]
  %s4 = inlined_call_operand.vmem [shape: f32[1,128], index: 4, kind: input, shape index: {}]
  %s5 = inlined_call_operand.vmem [shape: bf16[128,2], index: 5, kind: input, shape index: {}]
  %s6 = inlined_call_operand.vmem [shape: f32[1,2], index: 6, kind: input, shape index: {}]
  %s7 = inlined_call_operand.vmem [shape: f32[16,2], index: 7, kind: output, shape index: {}]
  %s8 = sld [smem:[#allocation0]]
  $region46: #{tpu_custom_call.1} parent=0
    _
  %s10 = ssub.s32 1, %s8
  %s11 = scalar_select 0, %s10, %s8
  $region1: #{tpu_custom_call.1} parent=0
    #allocation2 [shape = 'u8[262144]{0}', space=vmem, size = 0x40000, scoped, tag = 'input window, operand 1, single buffered']
    #allocation3 [shape = 's32[1]{0}', space=sflag, size = 0x4, scoped, tag = 'scoped memory for tpu_custom_call.1']
    #allocation4 [shape = 'u8[65536]{0}', space=vmem, size = 0x10000, scoped, tag = 'input window, operand 3, single buffered']
    #allocation5 [shape = 's32[1]{0}', space=sflag, size = 0x4, scoped, tag = 'scoped memory for tpu_custom_call.1']
    %12 = vsyncpa [#allocation3], 0
    %13 = vsyncpa [#allocation5], 0
    // Predicated region
    $region2: #{tpu_custom_call.1} parent=1 // pred_check
      _
    $region3: #{tpu_custom_call.1} parent=1 // pred_check_branch
      %15 = sbr.rel (0) target = $region5
    $region4: #{tpu_custom_call.1} parent=1 // pred_region
      _
    $region5: #{tpu_custom_call.1} parent=1 // pred_fallthru
      _
    // Predicated region
    $region6: #{tpu_custom_call.1} parent=1 // pred_check
      _
    $region7: #{tpu_custom_call.1} parent=1 // pred_check_branch
      %17 = sbr.rel (0) target = $region9
    $region8: #{tpu_custom_call.1} parent=1 // pred_region
      %s19 = ssub.s32 8192, 8192
      %20 = vsyncadd [#allocation3], %s19
      %s21 = sshll.u32 [#allocation2], 4
      %s22 = int_to_ptr.vmem [resolvable:$true] %s21
      %27 = dma.hbm_to_vmem [thread:$0]  %s1, 8192, %s22, [#allocation3], 128, 128, 8
    $region9: #{tpu_custom_call.1} parent=1 // pred_fallthru
      _
    // Predicated region
    $region10: #{tpu_custom_call.1} parent=1 // pred_check
      _
    $region11: #{tpu_custom_call.1} parent=1 // pred_check_branch
      %29 = sbr.rel (0) target = $region13
    $region12: #{tpu_custom_call.1} parent=1 // pred_region
      _
    $region13: #{tpu_custom_call.1} parent=1 // pred_fallthru
      _
    // Predicated region
    $region14: #{tpu_custom_call.1} parent=1 // pred_check
      _
    $region15: #{tpu_custom_call.1} parent=1 // pred_check_branch
      %31 = sbr.rel (0) target = $region17
    $region16: #{tpu_custom_call.1} parent=1 // pred_region
      %s33 = ssub.s32 2048, 2048
      %34 = vsyncadd [#allocation5], %s33
      %s35 = sshll.u32 [#allocation4], 4
      %s36 = int_to_ptr.vmem [resolvable:$true] %s35
      %41 = dma.hbm_to_vmem [thread:$0]  %s3, 2048, %s36, [#allocation5], 64, 64, 4
    $region17: #{tpu_custom_call.1} parent=1 // pred_fallthru
      _
    // Predicated region
    $region18: #{tpu_custom_call.1} parent=1 // pred_check
      _
    $region19: #{tpu_custom_call.1} parent=1 // pred_check_branch
      %43 = sbr.rel (0) target = $region21
    $region20: #{tpu_custom_call.1} parent=1 // pred_region
      _
    $region21: #{tpu_custom_call.1} parent=1 // pred_fallthru
      _
    // Predicated region
    $region22: #{tpu_custom_call.1} parent=1 // pred_check
      _
    $region23: #{tpu_custom_call.1} parent=1 // pred_check_branch
      %45 = sbr.rel (0) target = $region25
    $region24: #{tpu_custom_call.1} parent=1 // pred_region
      _
    $region25: #{tpu_custom_call.1} parent=1 // pred_fallthru
      _
    // Predicated region
    $region26: #{tpu_custom_call.1} parent=1 // pred_check
      _
    $region27: #{tpu_custom_call.1} parent=1 // pred_check_branch
      %47 = sbr.rel (0) target = $region29
    $region28: #{tpu_custom_call.1} parent=1 // pred_region
      _
    $region29: #{tpu_custom_call.1} parent=1 // pred_fallthru
      _
    // Predicated region
    $region30: #{tpu_custom_call.1} parent=1 // pred_check
      _
    $region31: #{tpu_custom_call.1} parent=1 // pred_check_branch
      %49 = sbr.rel (0) target = $region33
    $region32: #{tpu_custom_call.1} parent=1 // pred_region
      %50 = dma.done [#allocation3], 8192
    $region33: #{tpu_custom_call.1} parent=1 // pred_fallthru
      _
    // Predicated region
    $region34: #{tpu_custom_call.1} parent=1 // pred_check
      _
    $region35: #{tpu_custom_call.1} parent=1 // pred_check_branch
      %52 = sbr.rel (0) target = $region37
    $region36: #{tpu_custom_call.1} parent=1 // pred_region
      %53 = dma.done [#allocation5], 2048
    $region37: #{tpu_custom_call.1} parent=1 // pred_fallthru
      _
    %v55 = vld [vmem:[%s0] sm:$0xff]
    %v56 = vld [vmem:[%s0 + $0x8] sm:$0xff]
    %v57 = vld [vmem:[%s0 + $0x10] sm:$0xff]
    %v58 = vld [vmem:[%s0 + $0x18] sm:$0xff]
    %v59 = vld [vmem:[#allocation2] sm:$0xff]
    %v60 = vld [vmem:[#allocation2 + $0x8] sm:$0xff]
    %v61 = vld [vmem:[#allocation2 + $0x10] sm:$0xff]
    %v62 = vld [vmem:[#allocation2 + $0x18] sm:$0xff]
    %v63 = vld [vmem:[#allocation2 + $0x20] sm:$0xff]
    %v64 = vld [vmem:[#allocation2 + $0x28] sm:$0xff]
    %v65 = vld [vmem:[#allocation2 + $0x30] sm:$0xff]
    %v66 = vld [vmem:[#allocation2 + $0x38] sm:$0xff]
    %v67 = vld [vmem:[#allocation2 + $0x40] sm:$0xff]
    %v68 = vld [vmem:[#allocation2 + $0x48] sm:$0xff]
    %v69 = vld [vmem:[#allocation2 + $0x50] sm:$0xff]
    %v70 = vld [vmem:[#allocation2 + $0x58] sm:$0xff]
    %v71 = vld [vmem:[#allocation2 + $0x60] sm:$0xff]
    %v72 = vld [vmem:[#allocation2 + $0x68] sm:$0xff]
    %v73 = vld [vmem:[#allocation2 + $0x70] sm:$0xff]
    %v74 = vld [vmem:[#allocation2 + $0x78] sm:$0xff]
    %v75 = vld [vmem:[#allocation2 + $0x80] sm:$0xff]
    %v76 = vld [vmem:[#allocation2 + $0x88] sm:$0xff]
    %v77 = vld [vmem:[#allocation2 + $0x90] sm:$0xff]
    %v78 = vld [vmem:[#allocation2 + $0x98] sm:$0xff]
    %v79 = vld [vmem:[#allocation2 + $0xa0] sm:$0xff]
    %v80 = vld [vmem:[#allocation2 + $0xa8] sm:$0xff]
    %v81 = vld [vmem:[#allocation2 + $0xb0] sm:$0xff]
    %v82 = vld [vmem:[#allocation2 + $0xb8] sm:$0xff]
    %v83 = vld [vmem:[#allocation2 + $0xc0] sm:$0xff]
    %v84 = vld [vmem:[#allocation2 + $0xc8] sm:$0xff]
    %v85 = vld [vmem:[#allocation2 + $0xd0] sm:$0xff]
    %v86 = vld [vmem:[#allocation2 + $0xd8] sm:$0xff]
    %v87 = vld [vmem:[#allocation2 + $0xe0] sm:$0xff]
    %v88 = vld [vmem:[#allocation2 + $0xe8] sm:$0xff]
    %v89 = vld [vmem:[#allocation2 + $0xf0] sm:$0xff]
    %v90 = vld [vmem:[#allocation2 + $0xf8] sm:$0xff]
    %v91 = vld [vmem:[#allocation2 + $0x100] sm:$0xff]
    %v92 = vld [vmem:[#allocation2 + $0x108] sm:$0xff]
    %v93 = vld [vmem:[#allocation2 + $0x110] sm:$0xff]
    %v94 = vld [vmem:[#allocation2 + $0x118] sm:$0xff]
    %v95 = vld [vmem:[#allocation2 + $0x120] sm:$0xff]
    %v96 = vld [vmem:[#allocation2 + $0x128] sm:$0xff]
    %v97 = vld [vmem:[#allocation2 + $0x130] sm:$0xff]
    %v98 = vld [vmem:[#allocation2 + $0x138] sm:$0xff]
    %v99 = vld [vmem:[#allocation2 + $0x140] sm:$0xff]
    %v100 = vld [vmem:[#allocation2 + $0x148] sm:$0xff]
    %v101 = vld [vmem:[#allocation2 + $0x150] sm:$0xff]
    %v102 = vld [vmem:[#allocation2 + $0x158] sm:$0xff]
    %v103 = vld [vmem:[#allocation2 + $0x160] sm:$0xff]
    %v104 = vld [vmem:[#allocation2 + $0x168] sm:$0xff]
    %v105 = vld [vmem:[#allocation2 + $0x170] sm:$0xff]
    %v106 = vld [vmem:[#allocation2 + $0x178] sm:$0xff]
    %v107 = vld [vmem:[#allocation2 + $0x180] sm:$0xff]
    %v108 = vld [vmem:[#allocation2 + $0x188] sm:$0xff]
    %v109 = vld [vmem:[#allocation2 + $0x190] sm:$0xff]
    %v110 = vld [vmem:[#allocation2 + $0x198] sm:$0xff]
    %v111 = vld [vmem:[#allocation2 + $0x1a0] sm:$0xff]
    %v112 = vld [vmem:[#allocation2 + $0x1a8] sm:$0xff]
    %v113 = vld [vmem:[#allocation2 + $0x1b0] sm:$0xff]
    %v114 = vld [vmem:[#allocation2 + $0x1b8] sm:$0xff]
    %v115 = vld [vmem:[#allocation2 + $0x1c0] sm:$0xff]
    %v116 = vld [vmem:[#allocation2 + $0x1c8] sm:$0xff]
    %v117 = vld [vmem:[#allocation2 + $0x1d0] sm:$0xff]
    %v118 = vld [vmem:[#allocation2 + $0x1d8] sm:$0xff]
    %v119 = vld [vmem:[#allocation2 + $0x1e0] sm:$0xff]
    %v120 = vld [vmem:[#allocation2 + $0x1e8] sm:$0xff]
    %v121 = vld [vmem:[#allocation2 + $0x1f0] sm:$0xff]
    %v122 = vld [vmem:[#allocation2 + $0x1f8] sm:$0xff]
    %v123 = vld [vmem:[%s2] sm:$0x3]
    %v125 = vlaneseq
    %v126 = vshrl.u32 %v125, 7
    %v127 = vsub.s32 0, %v126
    %v128 = vrot.slane %v123, %v127
    %v129 = vlaneseq
    %v130 = vshrl.u32 %v129, 7
    %v131 = vsub.s32 1, %v130
    %v132 = vrot.slane %v123, %v131
    %v139 = vunpack.c.l.b16 %v55
    %v140 = vunpack.c.h.b16 %v55
    %v141 = vunpack.c.l.b16 %v56
    %v142 = vunpack.c.h.b16 %v56
    %v143 = vunpack.c.l.b16 %v57
    %v144 = vunpack.c.h.b16 %v57
    %v145 = vunpack.c.l.b16 %v58
    %v146 = vunpack.c.h.b16 %v58
    %v147 = vpack.c.b16 %v143, %v139
    %v148 = vpack.c.b16 %v144, %v140
    %v149 = vpack.c.b16 %v145, %v141
    %v150 = vpack.c.b16 %v146, %v142
    %v219 = vunpack.c.l.b16 %v59
    %v220 = vunpack.c.h.b16 %v59
    %v221 = vunpack.c.l.b16 %v60
    %v222 = vunpack.c.h.b16 %v60
    %v223 = vunpack.c.l.b16 %v61
    %v224 = vunpack.c.h.b16 %v61
    %v225 = vunpack.c.l.b16 %v62
    %v226 = vunpack.c.h.b16 %v62
    %v227 = vunpack.c.l.b16 %v63
    %v228 = vunpack.c.h.b16 %v63
    %v229 = vunpack.c.l.b16 %v64
    %v230 = vunpack.c.h.b16 %v64
    %v231 = vunpack.c.l.b16 %v65
    %v232 = vunpack.c.h.b16 %v65
    %v233 = vunpack.c.l.b16 %v66
    %v234 = vunpack.c.h.b16 %v66
    %v235 = vunpack.c.l.b16 %v67
    %v236 = vunpack.c.h.b16 %v67
    %v237 = vunpack.c.l.b16 %v68
    %v238 = vunpack.c.h.b16 %v68
    %v239 = vunpack.c.l.b16 %v69
    %v240 = vunpack.c.h.b16 %v69
    %v241 = vunpack.c.l.b16 %v70
    %v242 = vunpack.c.h.b16 %v70
    %v243 = vunpack.c.l.b16 %v71
    %v244 = vunpack.c.h.b16 %v71
    %v245 = vunpack.c.l.b16 %v72
    %v246 = vunpack.c.h.b16 %v72
    %v247 = vunpack.c.l.b16 %v73
    %v248 = vunpack.c.h.b16 %v73
    %v249 = vunpack.c.l.b16 %v74
    %v250 = vunpack.c.h.b16 %v74
    %v251 = vunpack.c.l.b16 %v75
    %v252 = vunpack.c.h.b16 %v75
    %v253 = vunpack.c.l.b16 %v76
    %v254 = vunpack.c.h.b16 %v76
    %v255 = vunpack.c.l.b16 %v77
    %v256 = vunpack.c.h.b16 %v77
    %v257 = vunpack.c.l.b16 %v78
    %v258 = vunpack.c.h.b16 %v78
    %v259 = vunpack.c.l.b16 %v79
    %v260 = vunpack.c.h.b16 %v79
    %v261 = vunpack.c.l.b16 %v80
    %v262 = vunpack.c.h.b16 %v80
    %v263 = vunpack.c.l.b16 %v81
    %v264 = vunpack.c.h.b16 %v81
    %v265 = vunpack.c.l.b16 %v82
    %v266 = vunpack.c.h.b16 %v82
    %v267 = vunpack.c.l.b16 %v83
    %v268 = vunpack.c.h.b16 %v83
    %v269 = vunpack.c.l.b16 %v84
    %v270 = vunpack.c.h.b16 %v84
    %v271 = vunpack.c.l.b16 %v85
    %v272 = vunpack.c.h.b16 %v85
    %v273 = vunpack.c.l.b16 %v86
    %v274 = vunpack.c.h.b16 %v86
    %v275 = vunpack.c.l.b16 %v87
    %v276 = vunpack.c.h.b16 %v87
    %v277 = vunpack.c.l.b16 %v88
    %v278 = vunpack.c.h.b16 %v88
    %v279 = vunpack.c.l.b16 %v89
    %v280 = vunpack.c.h.b16 %v89
    %v281 = vunpack.c.l.b16 %v90
    %v282 = vunpack.c.h.b16 %v90
    %v283 = vunpack.c.l.b16 %v91
    %v284 = vunpack.c.h.b16 %v91
    %v285 = vunpack.c.l.b16 %v92
    %v286 = vunpack.c.h.b16 %v92
    %v287 = vunpack.c.l.b16 %v93
    %v288 = vunpack.c.h.b16 %v93
    %v289 = vunpack.c.l.b16 %v94
    %v290 = vunpack.c.h.b16 %v94
    %v291 = vunpack.c.l.b16 %v95
    %v292 = vunpack.c.h.b16 %v95
    %v293 = vunpack.c.l.b16 %v96
    %v294 = vunpack.c.h.b16 %v96
    %v295 = vunpack.c.l.b16 %v97
    %v296 = vunpack.c.h.b16 %v97
    %v297 = vunpack.c.l.b16 %v98
    %v298 = vunpack.c.h.b16 %v98
    %v299 = vunpack.c.l.b16 %v99
    %v300 = vunpack.c.h.b16 %v99
    %v301 = vunpack.c.l.b16 %v100
    %v302 = vunpack.c.h.b16 %v100
    %v303 = vunpack.c.l.b16 %v101
    %v304 = vunpack.c.h.b16 %v101
    %v305 = vunpack.c.l.b16 %v102
    %v306 = vunpack.c.h.b16 %v102
    %v307 = vunpack.c.l.b16 %v103
    %v308 = vunpack.c.h.b16 %v103
    %v309 = vunpack.c.l.b16 %v104
    %v310 = vunpack.c.h.b16 %v104
    %v311 = vunpack.c.l.b16 %v105
    %v312 = vunpack.c.h.b16 %v105
    %v313 = vunpack.c.l.b16 %v106
    %v314 = vunpack.c.h.b16 %v106
    %v315 = vunpack.c.l.b16 %v107
    %v316 = vunpack.c.h.b16 %v107
    %v317 = vunpack.c.l.b16 %v108
    %v318 = vunpack.c.h.b16 %v108
    %v319 = vunpack.c.l.b16 %v109
    %v320 = vunpack.c.h.b16 %v109
    %v321 = vunpack.c.l.b16 %v110
    %v322 = vunpack.c.h.b16 %v110
    %v323 = vunpack.c.l.b16 %v111
    %v324 = vunpack.c.h.b16 %v111
    %v325 = vunpack.c.l.b16 %v112
    %v326 = vunpack.c.h.b16 %v112
    %v327 = vunpack.c.l.b16 %v113
    %v328 = vunpack.c.h.b16 %v113
    %v329 = vunpack.c.l.b16 %v114
    %v330 = vunpack.c.h.b16 %v114
    %v331 = vunpack.c.l.b16 %v115
    %v332 = vunpack.c.h.b16 %v115
    %v333 = vunpack.c.l.b16 %v116
    %v334 = vunpack.c.h.b16 %v116
    %v335 = vunpack.c.l.b16 %v117
    %v336 = vunpack.c.h.b16 %v117
    %v337 = vunpack.c.l.b16 %v118
    %v338 = vunpack.c.h.b16 %v118
    %v339 = vunpack.c.l.b16 %v119
    %v340 = vunpack.c.h.b16 %v119
    %v341 = vunpack.c.l.b16 %v120
    %v342 = vunpack.c.h.b16 %v120
    %v343 = vunpack.c.l.b16 %v121
    %v344 = vunpack.c.h.b16 %v121
    %v345 = vunpack.c.l.b16 %v122
    %v346 = vunpack.c.h.b16 %v122
    %v347 = vpack.c.b16 %v221, %v219
    %v348 = vpack.c.b16 %v222, %v220
    %v349 = vpack.c.b16 %v225, %v223
    %v350 = vpack.c.b16 %v226, %v224
    %v351 = vpack.c.b16 %v229, %v227
    %v352 = vpack.c.b16 %v230, %v228
    %v353 = vpack.c.b16 %v233, %v231
    %v354 = vpack.c.b16 %v234, %v232
    %v355 = vpack.c.b16 %v237, %v235
    %v356 = vpack.c.b16 %v238, %v236
    %v357 = vpack.c.b16 %v241, %v239
    %v358 = vpack.c.b16 %v242, %v240
    %v359 = vpack.c.b16 %v245, %v243
    %v360 = vpack.c.b16 %v246, %v244
    %v361 = vpack.c.b16 %v249, %v247
    %v362 = vpack.c.b16 %v250, %v248
    %v363 = vpack.c.b16 %v253, %v251
    %v364 = vpack.c.b16 %v254, %v252
    %v365 = vpack.c.b16 %v257, %v255
    %v366 = vpack.c.b16 %v258, %v256
    %v367 = vpack.c.b16 %v261, %v259
    %v368 = vpack.c.b16 %v262, %v260
    %v369 = vpack.c.b16 %v265, %v263
    %v370 = vpack.c.b16 %v266, %v264
    %v371 = vpack.c.b16 %v269, %v267
    %v372 = vpack.c.b16 %v270, %v268
    %v373 = vpack.c.b16 %v273, %v271
    %v374 = vpack.c.b16 %v274, %v272
    %v375 = vpack.c.b16 %v277, %v275
    %v376 = vpack.c.b16 %v278, %v276
    %v377 = vpack.c.b16 %v281, %v279
    %v378 = vpack.c.b16 %v282, %v280
    %v379 = vpack.c.b16 %v285, %v283
    %v380 = vpack.c.b16 %v286, %v284
    %v381 = vpack.c.b16 %v289, %v287
    %v382 = vpack.c.b16 %v290, %v288
    %v383 = vpack.c.b16 %v293, %v291
    %v384 = vpack.c.b16 %v294, %v292
    %v385 = vpack.c.b16 %v297, %v295
    %v386 = vpack.c.b16 %v298, %v296
    %v387 = vpack.c.b16 %v301, %v299
    %v388 = vpack.c.b16 %v302, %v300
    %v389 = vpack.c.b16 %v305, %v303
    %v390 = vpack.c.b16 %v306, %v304
    %v391 = vpack.c.b16 %v309, %v307
    %v392 = vpack.c.b16 %v310, %v308
    %v393 = vpack.c.b16 %v313, %v311
    %v394 = vpack.c.b16 %v314, %v312
    %v395 = vpack.c.b16 %v317, %v315
    %v396 = vpack.c.b16 %v318, %v316
    %v397 = vpack.c.b16 %v321, %v319
    %v398 = vpack.c.b16 %v322, %v320
    %v399 = vpack.c.b16 %v325, %v323
    %v400 = vpack.c.b16 %v326, %v324
    %v401 = vpack.c.b16 %v329, %v327
    %v402 = vpack.c.b16 %v330, %v328
    %v403 = vpack.c.b16 %v333, %v331
    %v404 = vpack.c.b16 %v334, %v332
    %v405 = vpack.c.b16 %v337, %v335
    %v406 = vpack.c.b16 %v338, %v336
    %v407 = vpack.c.b16 %v341, %v339
    %v408 = vpack.c.b16 %v342, %v340
    %v409 = vpack.c.b16 %v345, %v343
    %v410 = vpack.c.b16 %v346, %v344
    %475 = vmatprep.subr.bf16.mxu0 %v348
    %476 = vmatpush1.bf16.msra.mxu0 %v347
    %477 = vmatprep.subr.bf16.mxu0 %v350
    %478 = vmatpush1.bf16.msra.mxu0 %v349
    %479 = vmatprep.subr.bf16.mxu0 %v352
    %480 = vmatpush1.bf16.msra.mxu0 %v351
    %481 = vmatprep.subr.bf16.mxu0 %v354
    %482 = vmatpush1.bf16.msra.mxu0 %v353
    %483 = vmatprep.subr.bf16.mxu0 %v356
    %484 = vmatpush1.bf16.msra.mxu0 %v355
    %485 = vmatprep.subr.bf16.mxu0 %v358
    %486 = vmatpush1.bf16.msra.mxu0 %v357
    %487 = vmatprep.subr.bf16.mxu0 %v360
    %488 = vmatpush1.bf16.msra.mxu0 %v359
    %489 = vmatprep.subr.bf16.mxu0 %v362
    %490 = vmatpush1.bf16.msra.mxu0 %v361
    %491 = vmatprep.subr.bf16.mxu0 %v364
    %492 = vmatpush1.bf16.msra.mxu0 %v363
    %493 = vmatprep.subr.bf16.mxu0 %v366
    %494 = vmatpush1.bf16.msra.mxu0 %v365
    %495 = vmatprep.subr.bf16.mxu0 %v368
    %496 = vmatpush1.bf16.msra.mxu0 %v367
    %497 = vmatprep.subr.bf16.mxu0 %v370
    %498 = vmatpush1.bf16.msra.mxu0 %v369
    %499 = vmatprep.subr.bf16.mxu0 %v372
    %500 = vmatpush1.bf16.msra.mxu0 %v371
    %501 = vmatprep.subr.bf16.mxu0 %v374
    %502 = vmatpush1.bf16.msra.mxu0 %v373
    %503 = vmatprep.subr.bf16.mxu0 %v376
    %504 = vmatpush1.bf16.msra.mxu0 %v375
    %505 = vmatprep.subr.bf16.mxu0 %v378
    %506 = vmatpush1.bf16.msra.mxu0 %v377
    %507 = vmatprep.mubr.bf16.mxu0 %v148
    %508 = vmatmul.mubr.bf16.gmra.mrb[0].mxu0 %v147
    %v509 = vpop.f32.mrb[0].mxu0
    %v510 = vadd.f32 %v128, %v509
    %v511 = vpop.f32.mrb[0].mxu0
    %v512 = vadd.f32 %v132, %v511
    %v513 = vpop.f32.mrb[0].mxu0
    %v514 = vadd.f32 %v128, %v513
    %v515 = vpop.f32.mrb[0].mxu0
    %v516 = vadd.f32 %v132, %v515
    %517 = vdwg.mxu0
    %518 = vmatprep.subr.bf16.mxu0 %v380
    %519 = vmatpush1.bf16.msra.mxu0 %v379
    %520 = vmatprep.subr.bf16.mxu0 %v382
    %521 = vmatpush1.bf16.msra.mxu0 %v381
    %522 = vmatprep.subr.bf16.mxu0 %v384
    %523 = vmatpush1.bf16.msra.mxu0 %v383
    %524 = vmatprep.subr.bf16.mxu0 %v386
    %525 = vmatpush1.bf16.msra.mxu0 %v385
    %526 = vmatprep.subr.bf16.mxu0 %v388
    %527 = vmatpush1.bf16.msra.mxu0 %v387
    %528 = vmatprep.subr.bf16.mxu0 %v390
    %529 = vmatpush1.bf16.msra.mxu0 %v389
    %530 = vmatprep.subr.bf16.mxu0 %v392
    %531 = vmatpush1.bf16.msra.mxu0 %v391
    %532 = vmatprep.subr.bf16.mxu0 %v394
    %533 = vmatpush1.bf16.msra.mxu0 %v393
    %534 = vmatprep.subr.bf16.mxu0 %v396
    %535 = vmatpush1.bf16.msra.mxu0 %v395
    %536 = vmatprep.subr.bf16.mxu0 %v398
    %537 = vmatpush1.bf16.msra.mxu0 %v397
    %538 = vmatprep.subr.bf16.mxu0 %v400
    %539 = vmatpush1.bf16.msra.mxu0 %v399
    %540 = vmatprep.subr.bf16.mxu0 %v402
    %541 = vmatpush1.bf16.msra.mxu0 %v401
    %542 = vmatprep.subr.bf16.mxu0 %v404
    %543 = vmatpush1.bf16.msra.mxu0 %v403
    %544 = vmatprep.subr.bf16.mxu0 %v406
    %545 = vmatpush1.bf16.msra.mxu0 %v405
    %546 = vmatprep.subr.bf16.mxu0 %v408
    %547 = vmatpush1.bf16.msra.mxu0 %v407
    %548 = vmatprep.subr.bf16.mxu0 %v410
    %549 = vmatpush1.bf16.msra.mxu0 %v409
    %550 = vmatprep.mubr.bf16.mxu0 %v150
    %551 = vmatmul.mubr.bf16.gmra.mrb[0].mxu0 %v149
    %v552 = vpop.f32.mrb[0].mxu0
    %v553 = vadd.f32 %v510, %v552
    %v554 = vpop.f32.mrb[0].mxu0
    %v555 = vadd.f32 %v512, %v554
    %v556 = vpop.f32.mrb[0].mxu0
    %v557 = vadd.f32 %v514, %v556
    %v558 = vpop.f32.mrb[0].mxu0
    %v559 = vadd.f32 %v516, %v558
    %560 = vdwg.mxu0
    %v561 = vpack.c.bf16 %v557, %v553
    %v562 = vpack.c.bf16 %v559, %v555
    %v563 = vld [vmem:[#allocation4] sm:$0xf]
    %v564 = vld [vmem:[#allocation4 + $0x4] sm:$0xf]
    %v565 = vld [vmem:[#allocation4 + $0x8] sm:$0xf]
    %v566 = vld [vmem:[#allocation4 + $0xc] sm:$0xf]
    %v567 = vld [vmem:[#allocation4 + $0x10] sm:$0xf]
    %v568 = vld [vmem:[#allocation4 + $0x14] sm:$0xf]
    %v569 = vld [vmem:[#allocation4 + $0x18] sm:$0xf]
    %v570 = vld [vmem:[#allocation4 + $0x1c] sm:$0xf]
    %v571 = vld [vmem:[#allocation4 + $0x20] sm:$0xf]
    %v572 = vld [vmem:[#allocation4 + $0x24] sm:$0xf]
    %v573 = vld [vmem:[#allocation4 + $0x28] sm:$0xf]
    %v574 = vld [vmem:[#allocation4 + $0x2c] sm:$0xf]
    %v575 = vld [vmem:[#allocation4 + $0x30] sm:$0xf]
    %v576 = vld [vmem:[#allocation4 + $0x34] sm:$0xf]
    %v577 = vld [vmem:[#allocation4 + $0x38] sm:$0xf]
    %v578 = vld [vmem:[#allocation4 + $0x3c] sm:$0xf]
    %v579 = vld [vmem:[#allocation4 + $0x40] sm:$0xf]
    %v580 = vld [vmem:[#allocation4 + $0x44] sm:$0xf]
    %v581 = vld [vmem:[#allocation4 + $0x48] sm:$0xf]
    %v582 = vld [vmem:[#allocation4 + $0x4c] sm:$0xf]
    %v583 = vld [vmem:[#allocation4 + $0x50] sm:$0xf]
    %v584 = vld [vmem:[#allocation4 + $0x54] sm:$0xf]
    %v585 = vld [vmem:[#allocation4 + $0x58] sm:$0xf]
    %v586 = vld [vmem:[#allocation4 + $0x5c] sm:$0xf]
    %v587 = vld [vmem:[#allocation4 + $0x60] sm:$0xf]
    %v588 = vld [vmem:[#allocation4 + $0x64] sm:$0xf]
    %v589 = vld [vmem:[#allocation4 + $0x68] sm:$0xf]
    %v590 = vld [vmem:[#allocation4 + $0x6c] sm:$0xf]
    %v591 = vld [vmem:[#allocation4 + $0x70] sm:$0xf]
    %v592 = vld [vmem:[#allocation4 + $0x74] sm:$0xf]
    %v593 = vld [vmem:[#allocation4 + $0x78] sm:$0xf]
    %v594 = vld [vmem:[#allocation4 + $0x7c] sm:$0xf]
    %v595 = vld [vmem:[%s4] sm:$0x1]
    %v597 = vlaneseq
    %v598 = vshrl.u32 %v597, 7
    %v599 = vsub.s32 0, %v598
    %v600 = vrot.slane %v595, %v599
    %v634 = vunpack.c.l.b16 %v563
    %v635 = vunpack.c.l.b16 %v564
    %v636 = vunpack.c.l.b16 %v565
    %v637 = vunpack.c.l.b16 %v566
    %v638 = vunpack.c.l.b16 %v567
    %v639 = vunpack.c.l.b16 %v568
    %v640 = vunpack.c.l.b16 %v569
    %v641 = vunpack.c.l.b16 %v570
    %v642 = vunpack.c.l.b16 %v571
    %v643 = vunpack.c.l.b16 %v572
    %v644 = vunpack.c.l.b16 %v573
    %v645 = vunpack.c.l.b16 %v574
    %v646 = vunpack.c.l.b16 %v575
    %v647 = vunpack.c.l.b16 %v576
    %v648 = vunpack.c.l.b16 %v577
    %v649 = vunpack.c.l.b16 %v578
    %v650 = vunpack.c.l.b16 %v579
    %v651 = vunpack.c.l.b16 %v580
    %v652 = vunpack.c.l.b16 %v581
    %v653 = vunpack.c.l.b16 %v582
    %v654 = vunpack.c.l.b16 %v583
    %v655 = vunpack.c.l.b16 %v584
    %v656 = vunpack.c.l.b16 %v585
    %v657 = vunpack.c.l.b16 %v586
    %v658 = vunpack.c.l.b16 %v587
    %v659 = vunpack.c.l.b16 %v588
    %v660 = vunpack.c.l.b16 %v589
    %v661 = vunpack.c.l.b16 %v590
    %v662 = vunpack.c.l.b16 %v591
    %v663 = vunpack.c.l.b16 %v592
    %v664 = vunpack.c.l.b16 %v593
    %v665 = vunpack.c.l.b16 %v594
    %v666 = vpack.c.b16 %v635, %v634
    %v667 = vpack.c.b16 %v637, %v636
    %v668 = vpack.c.b16 %v639, %v638
    %v669 = vpack.c.b16 %v641, %v640
    %v670 = vpack.c.b16 %v643, %v642
    %v671 = vpack.c.b16 %v645, %v644
    %v672 = vpack.c.b16 %v647, %v646
    %v673 = vpack.c.b16 %v649, %v648
    %v674 = vpack.c.b16 %v651, %v650
    %v675 = vpack.c.b16 %v653, %v652
    %v676 = vpack.c.b16 %v655, %v654
    %v677 = vpack.c.b16 %v657, %v656
    %v678 = vpack.c.b16 %v659, %v658
    %v679 = vpack.c.b16 %v661, %v660
    %v680 = vpack.c.b16 %v663, %v662
    %v681 = vpack.c.b16 %v665, %v664
    %698 = vmatprep.subr.bf16.mxu0 0
    %699 = vmatpush1.bf16.msra.mxu0 %v666
    %700 = vmatprep.subr.bf16.mxu0 0
    %701 = vmatpush1.bf16.msra.mxu0 %v667
    %702 = vmatprep.subr.bf16.mxu0 0
    %703 = vmatpush1.bf16.msra.mxu0 %v668
    %704 = vmatprep.subr.bf16.mxu0 0
    %705 = vmatpush1.bf16.msra.mxu0 %v669
    %706 = vmatprep.subr.bf16.mxu0 0
    %707 = vmatpush1.bf16.msra.mxu0 %v670
    %708 = vmatprep.subr.bf16.mxu0 0
    %709 = vmatpush1.bf16.msra.mxu0 %v671
    %710 = vmatprep.subr.bf16.mxu0 0
    %711 = vmatpush1.bf16.msra.mxu0 %v672
    %712 = vmatprep.subr.bf16.mxu0 0
    %713 = vmatpush1.bf16.msra.mxu0 %v673
    %714 = vmatprep.subr.bf16.mxu0 0
    %715 = vmatpush1.bf16.msra.mxu0 %v674
    %716 = vmatprep.subr.bf16.mxu0 0
    %717 = vmatpush1.bf16.msra.mxu0 %v675
    %718 = vmatprep.subr.bf16.mxu0 0
    %719 = vmatpush1.bf16.msra.mxu0 %v676
    %720 = vmatprep.subr.bf16.mxu0 0
    %721 = vmatpush1.bf16.msra.mxu0 %v677
    %722 = vmatprep.subr.bf16.mxu0 0
    %723 = vmatpush1.bf16.msra.mxu0 %v678
    %724 = vmatprep.subr.bf16.mxu0 0
    %725 = vmatpush1.bf16.msra.mxu0 %v679
    %726 = vmatprep.subr.bf16.mxu0 0
    %727 = vmatpush1.bf16.msra.mxu0 %v680
    %728 = vmatprep.subr.bf16.mxu0 0
    %729 = vmatpush1.bf16.msra.mxu0 %v681
    %730 = vmatprep.mubr.bf16.mxu0 %v562
    %731 = vmatmul.mubr.bf16.gmra.mrb[0].mxu0 %v561
    %v732 = vpop.f32.mrb[0].mxu0
    %v733 = vadd.f32 %v600, %v732
    %v734 = vpop.f32.mrb[0].mxu0
    %v735 = vpop.f32.mrb[0].mxu0
    %v736 = vadd.f32 %v600, %v735
    %v737 = vpop.f32.mrb[0].mxu0
    %738 = vdwg.mxu0
    %v739 = vpack.c.bf16 %v736, %v733
    %v740 = vld [vmem:[%s5] sm:$0xf]
    %v741 = vld [vmem:[%s5 + $0x4] sm:$0xf]
    %v742 = vld [vmem:[%s5 + $0x8] sm:$0xf]
    %v743 = vld [vmem:[%s5 + $0xc] sm:$0xf]
    %v744 = vld [vmem:[%s5 + $0x10] sm:$0xf]
    %v745 = vld [vmem:[%s5 + $0x14] sm:$0xf]
    %v746 = vld [vmem:[%s5 + $0x18] sm:$0xf]
    %v747 = vld [vmem:[%s5 + $0x1c] sm:$0xf]
    %v748 = vld [vmem:[%s5 + $0x20] sm:$0xf]
    %v749 = vld [vmem:[%s5 + $0x24] sm:$0xf]
    %v750 = vld [vmem:[%s5 + $0x28] sm:$0xf]
    %v751 = vld [vmem:[%s5 + $0x2c] sm:$0xf]
    %v752 = vld [vmem:[%s5 + $0x30] sm:$0xf]
    %v753 = vld [vmem:[%s5 + $0x34] sm:$0xf]
    %v754 = vld [vmem:[%s5 + $0x38] sm:$0xf]
    %v755 = vld [vmem:[%s5 + $0x3c] sm:$0xf]
    %v756 = vld [vmem:[%s6] sm:$0x1]
    %v758 = vlaneseq
    %v759 = vshrl.u32 %v758, 7
    %v760 = vsub.s32 0, %v759
    %v761 = vrot.slane %v756, %v760
    %v779 = vunpack.c.l.b16 %v740
    %v780 = vunpack.c.l.b16 %v741
    %v781 = vunpack.c.l.b16 %v742
    %v782 = vunpack.c.l.b16 %v743
    %v783 = vunpack.c.l.b16 %v744
    %v784 = vunpack.c.l.b16 %v745
    %v785 = vunpack.c.l.b16 %v746
    %v786 = vunpack.c.l.b16 %v747
    %v787 = vunpack.c.l.b16 %v748
    %v788 = vunpack.c.l.b16 %v749
    %v789 = vunpack.c.l.b16 %v750
    %v790 = vunpack.c.l.b16 %v751
    %v791 = vunpack.c.l.b16 %v752
    %v792 = vunpack.c.l.b16 %v753
    %v793 = vunpack.c.l.b16 %v754
    %v794 = vunpack.c.l.b16 %v755
    %v795 = vpack.c.b16 %v780, %v779
    %v796 = vpack.c.b16 %v782, %v781
    %v797 = vpack.c.b16 %v784, %v783
    %v798 = vpack.c.b16 %v786, %v785
    %v799 = vpack.c.b16 %v788, %v787
    %v800 = vpack.c.b16 %v790, %v789
    %v801 = vpack.c.b16 %v792, %v791
    %v802 = vpack.c.b16 %v794, %v793
    %811 = vmatprep.subr.bf16.mxu0 0
    %812 = vmatpush1.bf16.msra.mxu0 %v795
    %813 = vmatprep.subr.bf16.mxu0 0
    %814 = vmatpush1.bf16.msra.mxu0 %v796
    %815 = vmatprep.subr.bf16.mxu0 0
    %816 = vmatpush1.bf16.msra.mxu0 %v797
    %817 = vmatprep.subr.bf16.mxu0 0
    %818 = vmatpush1.bf16.msra.mxu0 %v798
    %819 = vmatprep.subr.bf16.mxu0 0
    %820 = vmatpush1.bf16.msra.mxu0 %v799
    %821 = vmatprep.subr.bf16.mxu0 0
    %822 = vmatpush1.bf16.msra.mxu0 %v800
    %823 = vmatprep.subr.bf16.mxu0 0
    %824 = vmatpush1.bf16.msra.mxu0 %v801
    %825 = vmatprep.subr.bf16.mxu0 0
    %826 = vmatpush1.bf16.msra.mxu0 %v802
    %827 = vmatprep.subr.bf16.mxu0 0
    %828 = vmatpush1.bf16.msra.mxu0 0
    %829 = vmatprep.subr.bf16.mxu0 0
    %830 = vmatpush1.bf16.msra.mxu0 0
    %831 = vmatprep.subr.bf16.mxu0 0
    %832 = vmatpush1.bf16.msra.mxu0 0
    %833 = vmatprep.subr.bf16.mxu0 0
    %834 = vmatpush1.bf16.msra.mxu0 0
    %835 = vmatprep.subr.bf16.mxu0 0
    %836 = vmatpush1.bf16.msra.mxu0 0
    %837 = vmatprep.subr.bf16.mxu0 0
    %838 = vmatpush1.bf16.msra.mxu0 0
    %839 = vmatprep.subr.bf16.mxu0 0
    %840 = vmatpush1.bf16.msra.mxu0 0
    %841 = vmatprep.subr.bf16.mxu0 0
    %842 = vmatpush1.bf16.msra.mxu0 0
    %843 = vmatprep.mubr.bf16.mxu0 0
    %844 = vmatmul.mubr.bf16.gmra.mrb[0].mxu0 %v739
    %v845 = vpop.f32.mrb[0].mxu0
    %v846 = vadd.f32 %v761, %v845
    %v847 = vpop.f32.mrb[0].mxu0
    %v848 = vpop.f32.mrb[0].mxu0
    %v849 = vadd.f32 %v761, %v848
    %v850 = vpop.f32.mrb[0].mxu0
    %851 = vdwg.mxu0
    %vm852 = vcmask 15360
    %853 = vst.msk [vmem:[%s7] sm:$0xff] %vm852, %v846
    %854 = vst.msk [vmem:[%s7 + $0x8] sm:$0xff] %vm852, %v849
    // Predicated region
    $region38: #{tpu_custom_call.1} parent=1 // pred_check
      _
    $region39: #{tpu_custom_call.1} parent=1 // pred_check_branch
      %856 = sbr.rel (0) target = $region41
    $region40: #{tpu_custom_call.1} parent=1 // pred_region
      _
    $region41: #{tpu_custom_call.1} parent=1 // pred_fallthru
      _
    // Predicated region
    $region42: #{tpu_custom_call.1} parent=1 // pred_check
      _
    $region43: #{tpu_custom_call.1} parent=1 // pred_check_branch
      %858 = sbr.rel (0) target = $region45
    $region44: #{tpu_custom_call.1} parent=1 // pred_region
      _
    $region45: #{tpu_custom_call.1} parent=1 // pred_fallthru
      _
    %859 = vsyncpa [#allocation3], 1
    %860 = vsyncpa [#allocation5], 1

</llo_original>
